<compile_context>
chip_gen: v5e
topology: v5e:2x2
jax: 0.10.0
libtpu: 0.0.40
codegen_flags: <defaults>
</compile_context>

<pallas_src>
import jax
import jax.numpy as jnp
from jax import lax
from jax.experimental import pallas as pl
from jax.experimental.pallas import tpu as pltpu

_LANE = 128  # TPU lane width: pad the feature axis to this for unmasked stores


def _lstm_univariate_kernel(x_ref, w_ih_ref, w_hh_ref, b_ref, h0_ref, c0_ref,
                            out_ref):
    """Whole-sequence univariate LSTM bank, vectorized across lanes (features).

    All refs live in VMEM.  Gate rows are pre-ordered (i, f, o, g) so one
    grouped sigmoid covers rows 0:3 and one tanh covers row 3.  The time
    recurrence is an in-kernel fori_loop with h/c as loop-carried values.
    """
    # Hoist parameter loads out of the time loop (no per-step re-slicing,
    # no per-step re-broadcasts).
    w_ih = w_ih_ref[...]   # (4, Fp)
    w_hh = w_hh_ref[...]   # (4, Fp)
    b = b_ref[...]         # (4, Fp)

    T = out_ref.shape[0]

    def step(t, carry):
        h, c = carry                               # (1, Fp) each, in vregs
        x_t = x_ref[pl.ds(t, 1), :]                # (1, Fp)
        # One fused (4, Fp) VALU chain for all gate pre-activations.
        z = w_ih * x_t + w_hh * h + b              # rows: i, f, o, g
        s = jax.nn.sigmoid(z[0:3, :])              # grouped EUP push (i, f, o)
        g_g = jnp.tanh(z[3:4, :])
        i_g = s[0:1, :]
        f_g = s[1:2, :]
        o_g = s[2:3, :]
        c_new = f_g * c + i_g * g_g
        h_new = o_g * jnp.tanh(c_new)
        out_ref[pl.ds(t, 1), :] = 2.0 * h_new      # lane-dense (1, Fp) store
        return (h_new, c_new)

    lax.fori_loop(0, T, step, (h0_ref[...], c0_ref[...]),
                  unroll=(T <= 32))


def lstm_univariate_forward(x, w_ih, w_hh, b_ih, b_hh, h0, c0):
    """x: (T, F) float32.  Per-feature nn.LSTM(1, 1) params stacked along F in
    PyTorch gate order (i, f, g, o): w_ih, w_hh, b_ih, b_hh: (4, F);
    h0, c0: (1, F).  Returns 2 * h_t for every timestep, shape (T, F)."""
    T, F = x.shape
    Fp = ((F + _LANE - 1) // _LANE) * _LANE
    Fp = max(Fp, _LANE)

    # Reorder gate rows (i, f, g, o) -> (i, f, o, g) for grouped sigmoid/tanh.
    # Applied consistently to w_ih, w_hh and the folded bias.
    perm = jnp.array([0, 1, 3, 2], dtype=jnp.int32)
    w_ih_r = w_ih.astype(jnp.float32)[perm]
    w_hh_r = w_hh.astype(jnp.float32)[perm]
    b_r = (b_ih + b_hh).astype(jnp.float32)[perm]   # glue: fold the two biases

    pad = ((0, 0), (0, Fp - F))
    x_p = jnp.pad(x.astype(jnp.float32), pad)
    w_ih_p = jnp.pad(w_ih_r, pad)
    w_hh_p = jnp.pad(w_hh_r, pad)
    b_p = jnp.pad(b_r, pad)
    h0_p = jnp.pad(h0.astype(jnp.float32), pad)
    c0_p = jnp.pad(c0.astype(jnp.float32), pad)

    out = pl.pallas_call(
        _lstm_univariate_kernel,
        out_shape=jax.ShapeDtypeStruct((T, Fp), jnp.float32),
        in_specs=[pl.BlockSpec(memory_space=pltpu.MemorySpace.VMEM)] * 6,
        out_specs=pl.BlockSpec(memory_space=pltpu.MemorySpace.VMEM),
    )(x_p, w_ih_p, w_hh_p, b_p, h0_p, c0_p)
    return out[:, :F]


def _reference(x, w_ih, w_hh, b_ih, b_hh, h0, c0):
    """Pure-JAX reference of the same recurrence, original (i,f,g,o) order."""
    b = b_ih + b_hh

    def step(carry, x_t):
        h, c = carry
        x_t = x_t[None, :]                                  # (1, F)
        z = w_ih * x_t + w_hh * h + b                       # (4, F)
        i_g = jax.nn.sigmoid(z[0:1])
        f_g = jax.nn.sigmoid(z[1:2])
        g_g = jnp.tanh(z[2:3])
        o_g = jax.nn.sigmoid(z[3:4])
        c_new = f_g * c + i_g * g_g
        h_new = o_g * jnp.tanh(c_new)
        return (h_new, c_new), 2.0 * h_new[0]

    _, ys = lax.scan(step, (h0, c0), x)
    return ys


if __name__ == "__main__":
    FEATS = 8     # n_feats
    T = 8         # sequence length (rows of x)

    key = jax.random.PRNGKey(0)
    kx, kwih, kwhh, kbih, kbhh, kh0, kc0 = jax.random.split(key, 7)

    # Input sequence, shape (T, FEATS) -- each row is one multivariate sample.
    x = jax.random.normal(kx, (T, FEATS), dtype=jnp.float32)

    # Per-feature nn.LSTM(1, 1) parameters, PyTorch default init U(-1, 1)
    # (bound = 1/sqrt(hidden_size) = 1), stacked over features -> (4, F),
    # rows in PyTorch gate order (i, f, g, o).
    w_ih = jax.random.uniform(kwih, (4, FEATS), jnp.float32, -1.0, 1.0)
    w_hh = jax.random.uniform(kwhh, (4, FEATS), jnp.float32, -1.0, 1.0)
    b_ih = jax.random.uniform(kbih, (4, FEATS), jnp.float32, -1.0, 1.0)
    b_hh = jax.random.uniform(kbhh, (4, FEATS), jnp.float32, -1.0, 1.0)

    # Initial states (torch.rand / torch.randn in the module), deterministic.
    h0 = jax.random.uniform(kh0, (1, FEATS), jnp.float32)
    c0 = jax.random.normal(kc0, (1, FEATS), jnp.float32)

    out = lstm_univariate_forward(x, w_ih, w_hh, b_ih, b_hh, h0, c0)
    out = jax.block_until_ready(out)

    ref = _reference(x, w_ih, w_hh, b_ih, b_hh, h0, c0)
    assert out.shape == (T, FEATS)
    assert jnp.allclose(out, ref, atol=1e-5, rtol=1e-5), "mismatch vs reference"

    print("KERNEL_OK")
</pallas_src>

<mosaic_0001>
module attributes {stable_mosaic.version = 11 : i64} {
  func.func @_lstm_univariate_kernel(%arg0: memref<8x128xf32, #tpu.memory_space<vmem>>, %arg1: memref<4x128xf32, #tpu.memory_space<vmem>>, %arg2: memref<4x128xf32, #tpu.memory_space<vmem>>, %arg3: memref<4x128xf32, #tpu.memory_space<vmem>>, %arg4: memref<1x128xf32, #tpu.memory_space<vmem>>, %arg5: memref<1x128xf32, #tpu.memory_space<vmem>>, %arg6: memref<8x128xf32, #tpu.memory_space<vmem>>) attributes {dimension_semantics = [], scalar_prefetch = 0 : i64, scratch_operands = 0 : i64, tpu.core_type = #tpu.core_type<tc>} {
    %c0 = arith.constant 0 : index
    %c0_0 = arith.constant 0 : index
    %0 = vector.load %arg1[%c0, %c0_0] : memref<4x128xf32, #tpu.memory_space<vmem>>, vector<4x128xf32>
    %c0_1 = arith.constant 0 : index
    %c0_2 = arith.constant 0 : index
    %1 = vector.load %arg2[%c0_1, %c0_2] : memref<4x128xf32, #tpu.memory_space<vmem>>, vector<4x128xf32>
    %c0_3 = arith.constant 0 : index
    %c0_4 = arith.constant 0 : index
    %2 = vector.load %arg3[%c0_3, %c0_4] : memref<4x128xf32, #tpu.memory_space<vmem>>, vector<4x128xf32>
    %c0_5 = arith.constant 0 : index
    %c0_6 = arith.constant 0 : index
    %3 = vector.load %arg4[%c0_5, %c0_6] : memref<1x128xf32, #tpu.memory_space<vmem>>, vector<1x128xf32>
    %c0_7 = arith.constant 0 : index
    %c0_8 = arith.constant 0 : index
    %4 = vector.load %arg5[%c0_7, %c0_8] : memref<1x128xf32, #tpu.memory_space<vmem>>, vector<1x128xf32>
    %c0_i32 = arith.constant 0 : i32
    %5 = arith.index_cast %c0_i32 : i32 to index
    %c0_9 = arith.constant 0 : index
    %6 = vector.load %arg0[%5, %c0_9] : memref<8x128xf32, #tpu.memory_space<vmem>>, vector<1x128xf32>
    %7 = vector.broadcast %6 : vector<1x128xf32> to vector<4x128xf32>
    %8 = arith.mulf %0, %7 : vector<4x128xf32>
    %9 = vector.broadcast %3 : vector<1x128xf32> to vector<4x128xf32>
    %10 = arith.mulf %1, %9 : vector<4x128xf32>
    %11 = arith.addf %8, %10 : vector<4x128xf32>
    %12 = arith.addf %11, %2 : vector<4x128xf32>
    %13 = vector.extract_strided_slice %12 {offsets = [0, 0], sizes = [3, 128], strides = [1, 1]} : vector<4x128xf32> to vector<3x128xf32>
    %14 = arith.negf %13 : vector<3x128xf32>
    %15 = math.exp %14 : vector<3x128xf32>
    %cst = arith.constant 1.000000e+00 : f32
    %16 = vector.broadcast %cst : f32 to vector<3x128xf32>
    %17 = arith.addf %16, %15 : vector<3x128xf32>
    %18 = arith.divf %16, %17 : vector<3x128xf32>
    %19 = vector.extract_strided_slice %12 {offsets = [3, 0], sizes = [1, 128], strides = [1, 1]} : vector<4x128xf32> to vector<1x128xf32>
    %20 = math.tanh %19 : vector<1x128xf32>
    %21 = vector.extract_strided_slice %18 {offsets = [0, 0], sizes = [1, 128], strides = [1, 1]} : vector<3x128xf32> to vector<1x128xf32>
    %22 = vector.extract_strided_slice %18 {offsets = [1, 0], sizes = [1, 128], strides = [1, 1]} : vector<3x128xf32> to vector<1x128xf32>
    %23 = vector.extract_strided_slice %18 {offsets = [2, 0], sizes = [1, 128], strides = [1, 1]} : vector<3x128xf32> to vector<1x128xf32>
    %24 = arith.mulf %22, %4 : vector<1x128xf32>
    %25 = arith.mulf %21, %20 : vector<1x128xf32>
    %26 = arith.addf %24, %25 : vector<1x128xf32>
    %27 = math.tanh %26 : vector<1x128xf32>
    %28 = arith.mulf %23, %27 : vector<1x128xf32>
    %cst_10 = arith.constant 2.000000e+00 : f32
    %29 = vector.broadcast %cst_10 : f32 to vector<1x128xf32>
    %30 = arith.mulf %29, %28 : vector<1x128xf32>
    %31 = arith.index_cast %c0_i32 : i32 to index
    %c0_11 = arith.constant 0 : index
    %32 = vector.load %arg6[%31, %c0_11] : memref<8x128xf32, #tpu.memory_space<vmem>>, vector<1x128xf32>
    tpu.vector_store %arg6[%31, %c0_11], %30 {strides = array<i32>} : memref<8x128xf32, #tpu.memory_space<vmem>>, vector<1x128xf32>,
    %c1_i32 = arith.constant 1 : i32
    %33 = arith.index_cast %c1_i32 : i32 to index
    %c0_12 = arith.constant 0 : index
    %34 = vector.load %arg0[%33, %c0_12] : memref<8x128xf32, #tpu.memory_space<vmem>>, vector<1x128xf32>
    %35 = vector.broadcast %34 : vector<1x128xf32> to vector<4x128xf32>
    %36 = arith.mulf %0, %35 : vector<4x128xf32>
    %37 = vector.broadcast %28 : vector<1x128xf32> to vector<4x128xf32>
    %38 = arith.mulf %1, %37 : vector<4x128xf32>
    %39 = arith.addf %36, %38 : vector<4x128xf32>
    %40 = arith.addf %39, %2 : vector<4x128xf32>
    %41 = vector.extract_strided_slice %40 {offsets = [0, 0], sizes = [3, 128], strides = [1, 1]} : vector<4x128xf32> to vector<3x128xf32>
    %42 = arith.negf %41 : vector<3x128xf32>
    %43 = math.exp %42 : vector<3x128xf32>
    %cst_13 = arith.constant 1.000000e+00 : f32
    %44 = vector.broadcast %cst_13 : f32 to vector<3x128xf32>
    %45 = arith.addf %44, %43 : vector<3x128xf32>
    %46 = arith.divf %44, %45 : vector<3x128xf32>
    %47 = vector.extract_strided_slice %40 {offsets = [3, 0], sizes = [1, 128], strides = [1, 1]} : vector<4x128xf32> to vector<1x128xf32>
    %48 = math.tanh %47 : vector<1x128xf32>
    %49 = vector.extract_strided_slice %46 {offsets = [0, 0], sizes = [1, 128], strides = [1, 1]} : vector<3x128xf32> to vector<1x128xf32>
    %50 = vector.extract_strided_slice %46 {offsets = [1, 0], sizes = [1, 128], strides = [1, 1]} : vector<3x128xf32> to vector<1x128xf32>
    %51 = vector.extract_strided_slice %46 {offsets = [2, 0], sizes = [1, 128], strides = [1, 1]} : vector<3x128xf32> to vector<1x128xf32>
    %52 = arith.mulf %50, %26 : vector<1x128xf32>
    %53 = arith.mulf %49, %48 : vector<1x128xf32>
    %54 = arith.addf %52, %53 : vector<1x128xf32>
    %55 = math.tanh %54 : vector<1x128xf32>
    %56 = arith.mulf %51, %55 : vector<1x128xf32>
    %cst_14 = arith.constant 2.000000e+00 : f32
    %57 = vector.broadcast %cst_14 : f32 to vector<1x128xf32>
    %58 = arith.mulf %57, %56 : vector<1x128xf32>
    %59 = arith.index_cast %c1_i32 : i32 to index
    %c0_15 = arith.constant 0 : index
    %60 = vector.load %arg6[%59, %c0_15] : memref<8x128xf32, #tpu.memory_space<vmem>>, vector<1x128xf32>
    tpu.vector_store %arg6[%59, %c0_15], %58 {strides = array<i32>} : memref<8x128xf32, #tpu.memory_space<vmem>>, vector<1x128xf32>,
    %c2_i32 = arith.constant 2 : i32
    %61 = arith.index_cast %c2_i32 : i32 to index
    %c0_16 = arith.constant 0 : index
    %62 = vector.load %arg0[%61, %c0_16] : memref<8x128xf32, #tpu.memory_space<vmem>>, vector<1x128xf32>
    %63 = vector.broadcast %62 : vector<1x128xf32> to vector<4x128xf32>
    %64 = arith.mulf %0, %63 : vector<4x128xf32>
    %65 = vector.broadcast %56 : vector<1x128xf32> to vector<4x128xf32>
    %66 = arith.mulf %1, %65 : vector<4x128xf32>
    %67 = arith.addf %64, %66 : vector<4x128xf32>
    %68 = arith.addf %67, %2 : vector<4x128xf32>
    %69 = vector.extract_strided_slice %68 {offsets = [0, 0], sizes = [3, 128], strides = [1, 1]} : vector<4x128xf32> to vector<3x128xf32>
    %70 = arith.negf %69 : vector<3x128xf32>
    %71 = math.exp %70 : vector<3x128xf32>
    %cst_17 = arith.constant 1.000000e+00 : f32
    %72 = vector.broadcast %cst_17 : f32 to vector<3x128xf32>
    %73 = arith.addf %72, %71 : vector<3x128xf32>
    %74 = arith.divf %72, %73 : vector<3x128xf32>
    %75 = vector.extract_strided_slice %68 {offsets = [3, 0], sizes = [1, 128], strides = [1, 1]} : vector<4x128xf32> to vector<1x128xf32>
    %76 = math.tanh %75 : vector<1x128xf32>
    %77 = vector.extract_strided_slice %74 {offsets = [0, 0], sizes = [1, 128], strides = [1, 1]} : vector<3x128xf32> to vector<1x128xf32>
    %78 = vector.extract_strided_slice %74 {offsets = [1, 0], sizes = [1, 128], strides = [1, 1]} : vector<3x128xf32> to vector<1x128xf32>
    %79 = vector.extract_strided_slice %74 {offsets = [2, 0], sizes = [1, 128], strides = [1, 1]} : vector<3x128xf32> to vector<1x128xf32>
    %80 = arith.mulf %78, %54 : vector<1x128xf32>
    %81 = arith.mulf %77, %76 : vector<1x128xf32>
    %82 = arith.addf %80, %81 : vector<1x128xf32>
    %83 = math.tanh %82 : vector<1x128xf32>
    %84 = arith.mulf %79, %83 : vector<1x128xf32>
    %cst_18 = arith.constant 2.000000e+00 : f32
    %85 = vector.broadcast %cst_18 : f32 to vector<1x128xf32>
    %86 = arith.mulf %85, %84 : vector<1x128xf32>
    %87 = arith.index_cast %c2_i32 : i32 to index
    %c0_19 = arith.constant 0 : index
    %88 = vector.load %arg6[%87, %c0_19] : memref<8x128xf32, #tpu.memory_space<vmem>>, vector<1x128xf32>
    tpu.vector_store %arg6[%87, %c0_19], %86 {strides = array<i32>} : memref<8x128xf32, #tpu.memory_space<vmem>>, vector<1x128xf32>,
    %c3_i32 = arith.constant 3 : i32
    %89 = arith.index_cast %c3_i32 : i32 to index
    %c0_20 = arith.constant 0 : index
    %90 = vector.load %arg0[%89, %c0_20] : memref<8x128xf32, #tpu.memory_space<vmem>>, vector<1x128xf32>
    %91 = vector.broadcast %90 : vector<1x128xf32> to vector<4x128xf32>
    %92 = arith.mulf %0, %91 : vector<4x128xf32>
    %93 = vector.broadcast %84 : vector<1x128xf32> to vector<4x128xf32>
    %94 = arith.mulf %1, %93 : vector<4x128xf32>
    %95 = arith.addf %92, %94 : vector<4x128xf32>
    %96 = arith.addf %95, %2 : vector<4x128xf32>
    %97 = vector.extract_strided_slice %96 {offsets = [0, 0], sizes = [3, 128], strides = [1, 1]} : vector<4x128xf32> to vector<3x128xf32>
    %98 = arith.negf %97 : vector<3x128xf32>
    %99 = math.exp %98 : vector<3x128xf32>
    %cst_21 = arith.constant 1.000000e+00 : f32
    %100 = vector.broadcast %cst_21 : f32 to vector<3x128xf32>
    %101 = arith.addf %100, %99 : vector<3x128xf32>
    %102 = arith.divf %100, %101 : vector<3x128xf32>
    %103 = vector.extract_strided_slice %96 {offsets = [3, 0], sizes = [1, 128], strides = [1, 1]} : vector<4x128xf32> to vector<1x128xf32>
    %104 = math.tanh %103 : vector<1x128xf32>
    %105 = vector.extract_strided_slice %102 {offsets = [0, 0], sizes = [1, 128], strides = [1, 1]} : vector<3x128xf32> to vector<1x128xf32>
    %106 = vector.extract_strided_slice %102 {offsets = [1, 0], sizes = [1, 128], strides = [1, 1]} : vector<3x128xf32> to vector<1x128xf32>
    %107 = vector.extract_strided_slice %102 {offsets = [2, 0], sizes = [1, 128], strides = [1, 1]} : vector<3x128xf32> to vector<1x128xf32>
    %108 = arith.mulf %106, %82 : vector<1x128xf32>
    %109 = arith.mulf %105, %104 : vector<1x128xf32>
    %110 = arith.addf %108, %109 : vector<1x128xf32>
    %111 = math.tanh %110 : vector<1x128xf32>
    %112 = arith.mulf %107, %111 : vector<1x128xf32>
    %cst_22 = arith.constant 2.000000e+00 : f32
    %113 = vector.broadcast %cst_22 : f32 to vector<1x128xf32>
    %114 = arith.mulf %113, %112 : vector<1x128xf32>
    %115 = arith.index_cast %c3_i32 : i32 to index
    %c0_23 = arith.constant 0 : index
    %116 = vector.load %arg6[%115, %c0_23] : memref<8x128xf32, #tpu.memory_space<vmem>>, vector<1x128xf32>
    tpu.vector_store %arg6[%115, %c0_23], %114 {strides = array<i32>} : memref<8x128xf32, #tpu.memory_space<vmem>>, vector<1x128xf32>,
    %c4_i32 = arith.constant 4 : i32
    %117 = arith.index_cast %c4_i32 : i32 to index
    %c0_24 = arith.constant 0 : index
    %118 = vector.load %arg0[%117, %c0_24] : memref<8x128xf32, #tpu.memory_space<vmem>>, vector<1x128xf32>
    %119 = vector.broadcast %118 : vector<1x128xf32> to vector<4x128xf32>
    %120 = arith.mulf %0, %119 : vector<4x128xf32>
    %121 = vector.broadcast %112 : vector<1x128xf32> to vector<4x128xf32>
    %122 = arith.mulf %1, %121 : vector<4x128xf32>
    %123 = arith.addf %120, %122 : vector<4x128xf32>
    %124 = arith.addf %123, %2 : vector<4x128xf32>
    %125 = vector.extract_strided_slice %124 {offsets = [0, 0], sizes = [3, 128], strides = [1, 1]} : vector<4x128xf32> to vector<3x128xf32>
    %126 = arith.negf %125 : vector<3x128xf32>
    %127 = math.exp %126 : vector<3x128xf32>
    %cst_25 = arith.constant 1.000000e+00 : f32
    %128 = vector.broadcast %cst_25 : f32 to vector<3x128xf32>
    %129 = arith.addf %128, %127 : vector<3x128xf32>
    %130 = arith.divf %128, %129 : vector<3x128xf32>
    %131 = vector.extract_strided_slice %124 {offsets = [3, 0], sizes = [1, 128], strides = [1, 1]} : vector<4x128xf32> to vector<1x128xf32>
    %132 = math.tanh %131 : vector<1x128xf32>
    %133 = vector.extract_strided_slice %130 {offsets = [0, 0], sizes = [1, 128], strides = [1, 1]} : vector<3x128xf32> to vector<1x128xf32>
    %134 = vector.extract_strided_slice %130 {offsets = [1, 0], sizes = [1, 128], strides = [1, 1]} : vector<3x128xf32> to vector<1x128xf32>
    %135 = vector.extract_strided_slice %130 {offsets = [2, 0], sizes = [1, 128], strides = [1, 1]} : vector<3x128xf32> to vector<1x128xf32>
    %136 = arith.mulf %134, %110 : vector<1x128xf32>
    %137 = arith.mulf %133, %132 : vector<1x128xf32>
    %138 = arith.addf %136, %137 : vector<1x128xf32>
    %139 = math.tanh %138 : vector<1x128xf32>
    %140 = arith.mulf %135, %139 : vector<1x128xf32>
    %cst_26 = arith.constant 2.000000e+00 : f32
    %141 = vector.broadcast %cst_26 : f32 to vector<1x128xf32>
    %142 = arith.mulf %141, %140 : vector<1x128xf32>
    %143 = arith.index_cast %c4_i32 : i32 to index
    %c0_27 = arith.constant 0 : index
    %144 = vector.load %arg6[%143, %c0_27] : memref<8x128xf32, #tpu.memory_space<vmem>>, vector<1x128xf32>
    tpu.vector_store %arg6[%143, %c0_27], %142 {strides = array<i32>} : memref<8x128xf32, #tpu.memory_space<vmem>>, vector<1x128xf32>,
    %c5_i32 = arith.constant 5 : i32
    %145 = arith.index_cast %c5_i32 : i32 to index
    %c0_28 = arith.constant 0 : index
    %146 = vector.load %arg0[%145, %c0_28] : memref<8x128xf32, #tpu.memory_space<vmem>>, vector<1x128xf32>
    %147 = vector.broadcast %146 : vector<1x128xf32> to vector<4x128xf32>
    %148 = arith.mulf %0, %147 : vector<4x128xf32>
    %149 = vector.broadcast %140 : vector<1x128xf32> to vector<4x128xf32>
    %150 = arith.mulf %1, %149 : vector<4x128xf32>
    %151 = arith.addf %148, %150 : vector<4x128xf32>
    %152 = arith.addf %151, %2 : vector<4x128xf32>
    %153 = vector.extract_strided_slice %152 {offsets = [0, 0], sizes = [3, 128], strides = [1, 1]} : vector<4x128xf32> to vector<3x128xf32>
    %154 = arith.negf %153 : vector<3x128xf32>
    %155 = math.exp %154 : vector<3x128xf32>
    %cst_29 = arith.constant 1.000000e+00 : f32
    %156 = vector.broadcast %cst_29 : f32 to vector<3x128xf32>
    %157 = arith.addf %156, %155 : vector<3x128xf32>
    %158 = arith.divf %156, %157 : vector<3x128xf32>
    %159 = vector.extract_strided_slice %152 {offsets = [3, 0], sizes = [1, 128], strides = [1, 1]} : vector<4x128xf32> to vector<1x128xf32>
    %160 = math.tanh %159 : vector<1x128xf32>
    %161 = vector.extract_strided_slice %158 {offsets = [0, 0], sizes = [1, 128], strides = [1, 1]} : vector<3x128xf32> to vector<1x128xf32>
    %162 = vector.extract_strided_slice %158 {offsets = [1, 0], sizes = [1, 128], strides = [1, 1]} : vector<3x128xf32> to vector<1x128xf32>
    %163 = vector.extract_strided_slice %158 {offsets = [2, 0], sizes = [1, 128], strides = [1, 1]} : vector<3x128xf32> to vector<1x128xf32>
    %164 = arith.mulf %162, %138 : vector<1x128xf32>
    %165 = arith.mulf %161, %160 : vector<1x128xf32>
    %166 = arith.addf %164, %165 : vector<1x128xf32>
    %167 = math.tanh %166 : vector<1x128xf32>
    %168 = arith.mulf %163, %167 : vector<1x128xf32>
    %cst_30 = arith.constant 2.000000e+00 : f32
    %169 = vector.broadcast %cst_30 : f32 to vector<1x128xf32>
    %170 = arith.mulf %169, %168 : vector<1x128xf32>
    %171 = arith.index_cast %c5_i32 : i32 to index
    %c0_31 = arith.constant 0 : index
    %172 = vector.load %arg6[%171, %c0_31] : memref<8x128xf32, #tpu.memory_space<vmem>>, vector<1x128xf32>
    tpu.vector_store %arg6[%171, %c0_31], %170 {strides = array<i32>} : memref<8x128xf32, #tpu.memory_space<vmem>>, vector<1x128xf32>,
    %c6_i32 = arith.constant 6 : i32
    %173 = arith.index_cast %c6_i32 : i32 to index
    %c0_32 = arith.constant 0 : index
    %174 = vector.load %arg0[%173, %c0_32] : memref<8x128xf32, #tpu.memory_space<vmem>>, vector<1x128xf32>
    %175 = vector.broadcast %174 : vector<1x128xf32> to vector<4x128xf32>
    %176 = arith.mulf %0, %175 : vector<4x128xf32>
    %177 = vector.broadcast %168 : vector<1x128xf32> to vector<4x128xf32>
    %178 = arith.mulf %1, %177 : vector<4x128xf32>
    %179 = arith.addf %176, %178 : vector<4x128xf32>
    %180 = arith.addf %179, %2 : vector<4x128xf32>
    %181 = vector.extract_strided_slice %180 {offsets = [0, 0], sizes = [3, 128], strides = [1, 1]} : vector<4x128xf32> to vector<3x128xf32>
    %182 = arith.negf %181 : vector<3x128xf32>
    %183 = math.exp %182 : vector<3x128xf32>
    %cst_33 = arith.constant 1.000000e+00 : f32
    %184 = vector.broadcast %cst_33 : f32 to vector<3x128xf32>
    %185 = arith.addf %184, %183 : vector<3x128xf32>
    %186 = arith.divf %184, %185 : vector<3x128xf32>
    %187 = vector.extract_strided_slice %180 {offsets = [3, 0], sizes = [1, 128], strides = [1, 1]} : vector<4x128xf32> to vector<1x128xf32>
    %188 = math.tanh %187 : vector<1x128xf32>
    %189 = vector.extract_strided_slice %186 {offsets = [0, 0], sizes = [1, 128], strides = [1, 1]} : vector<3x128xf32> to vector<1x128xf32>
    %190 = vector.extract_strided_slice %186 {offsets = [1, 0], sizes = [1, 128], strides = [1, 1]} : vector<3x128xf32> to vector<1x128xf32>
    %191 = vector.extract_strided_slice %186 {offsets = [2, 0], sizes = [1, 128], strides = [1, 1]} : vector<3x128xf32> to vector<1x128xf32>
    %192 = arith.mulf %190, %166 : vector<1x128xf32>
    %193 = arith.mulf %189, %188 : vector<1x128xf32>
    %194 = arith.addf %192, %193 : vector<1x128xf32>
    %195 = math.tanh %194 : vector<1x128xf32>
    %196 = arith.mulf %191, %195 : vector<1x128xf32>
    %cst_34 = arith.constant 2.000000e+00 : f32
    %197 = vector.broadcast %cst_34 : f32 to vector<1x128xf32>
    %198 = arith.mulf %197, %196 : vector<1x128xf32>
    %199 = arith.index_cast %c6_i32 : i32 to index
    %c0_35 = arith.constant 0 : index
    %200 = vector.load %arg6[%199, %c0_35] : memref<8x128xf32, #tpu.memory_space<vmem>>, vector<1x128xf32>
    tpu.vector_store %arg6[%199, %c0_35], %198 {strides = array<i32>} : memref<8x128xf32, #tpu.memory_space<vmem>>, vector<1x128xf32>,
    %c7_i32 = arith.constant 7 : i32
    %201 = arith.index_cast %c7_i32 : i32 to index
    %c0_36 = arith.constant 0 : index
    %202 = vector.load %arg0[%201, %c0_36] : memref<8x128xf32, #tpu.memory_space<vmem>>, vector<1x128xf32>
    %203 = vector.broadcast %202 : vector<1x128xf32> to vector<4x128xf32>
    %204 = arith.mulf %0, %203 : vector<4x128xf32>
    %205 = vector.broadcast %196 : vector<1x128xf32> to vector<4x128xf32>
    %206 = arith.mulf %1, %205 : vector<4x128xf32>
    %207 = arith.addf %204, %206 : vector<4x128xf32>
    %208 = arith.addf %207, %2 : vector<4x128xf32>
    %209 = vector.extract_strided_slice %208 {offsets = [0, 0], sizes = [3, 128], strides = [1, 1]} : vector<4x128xf32> to vector<3x128xf32>
    %210 = arith.negf %209 : vector<3x128xf32>
    %211 = math.exp %210 : vector<3x128xf32>
    %cst_37 = arith.constant 1.000000e+00 : f32
    %212 = vector.broadcast %cst_37 : f32 to vector<3x128xf32>
    %213 = arith.addf %212, %211 : vector<3x128xf32>
    %214 = arith.divf %212, %213 : vector<3x128xf32>
    %215 = vector.extract_strided_slice %208 {offsets = [3, 0], sizes = [1, 128], strides = [1, 1]} : vector<4x128xf32> to vector<1x128xf32>
    %216 = math.tanh %215 : vector<1x128xf32>
    %217 = vector.extract_strided_slice %214 {offsets = [0, 0], sizes = [1, 128], strides = [1, 1]} : vector<3x128xf32> to vector<1x128xf32>
    %218 = vector.extract_strided_slice %214 {offsets = [1, 0], sizes = [1, 128], strides = [1, 1]} : vector<3x128xf32> to vector<1x128xf32>
    %219 = vector.extract_strided_slice %214 {offsets = [2, 0], sizes = [1, 128], strides = [1, 1]} : vector<3x128xf32> to vector<1x128xf32>
    %220 = arith.mulf %218, %194 : vector<1x128xf32>
    %221 = arith.mulf %217, %216 : vector<1x128xf32>
    %222 = arith.addf %220, %221 : vector<1x128xf32>
    %223 = math.tanh %222 : vector<1x128xf32>
    %224 = arith.mulf %219, %223 : vector<1x128xf32>
    %cst_38 = arith.constant 2.000000e+00 : f32
    %225 = vector.broadcast %cst_38 : f32 to vector<1x128xf32>
    %226 = arith.mulf %225, %224 : vector<1x128xf32>
    %227 = arith.index_cast %c7_i32 : i32 to index
    %c0_39 = arith.constant 0 : index
    %228 = vector.load %arg6[%227, %c0_39] : memref<8x128xf32, #tpu.memory_space<vmem>>, vector<1x128xf32>
    tpu.vector_store %arg6[%227, %c0_39], %226 {strides = array<i32>} : memref<8x128xf32, #tpu.memory_space<vmem>>, vector<1x128xf32>,
    %c8_i32 = arith.constant 8 : i32
    return
  }
}

</mosaic_0001>

<llo_original>
// kernel: tpu_custom_call.1
$region0: #{tpu_custom_call.1}
  #allocation0 [shape = 'u32[]', space=smem, size = 0x4, offset = 0x4, fixed_abs, tag = 'smem constant byte address 0x4 - core index']
  #allocation1 [shape = 'u32[72,128]{1,0:T(1,128)}', space=vmem, size = 0x9000, scoped, tag = 'internal scratch']
  %s0 = inlined_call_operand.hbm [shape: f32[8,128], index: 0, kind: input, shape index: {}]
  %s1 = inlined_call_operand.hbm [shape: f32[4,128], index: 1, kind: input, shape index: {}]
  %s2 = inlined_call_operand.hbm [shape: f32[4,128], index: 2, kind: input, shape index: {}]
  %s3 = inlined_call_operand.hbm [shape: f32[4,128], index: 3, kind: input, shape index: {}]
  %s4 = inlined_call_operand.vmem [shape: f32[1,128], index: 4, kind: input, shape index: {}]
  %s5 = inlined_call_operand.vmem [shape: f32[1,128], index: 5, kind: input, shape index: {}]
  %s6 = inlined_call_operand.hbm [shape: f32[8,128], index: 6, kind: output, shape index: {}]
  %s7 = sld [smem:[#allocation0]]
  $region50: #{tpu_custom_call.1} parent=0
    _
  %s9 = ssub.s32 1, %s7
  %s10 = scalar_select 0, %s9, %s7
  $region1: #{tpu_custom_call.1} parent=0
    #allocation2 [shape = 'u8[4096]{0}', space=vmem, size = 0x1000, scoped, tag = 'input window, operand 0, single buffered']
    #allocation3 [shape = 's32[1]{0}', space=sflag, size = 0x4, scoped, tag = 'scoped memory for tpu_custom_call.1']
    #allocation4 [shape = 's32[1]{0}', space=sflag, size = 0x4, scoped, tag = 'scoped memory for tpu_custom_call.1']
    #allocation5 [shape = 'u8[2048]{0}', space=vmem, size = 0x800, scoped, tag = 'input window, operand 1, single buffered']
    #allocation6 [shape = 's32[1]{0}', space=sflag, size = 0x4, scoped, tag = 'scoped memory for tpu_custom_call.1']
    #allocation7 [shape = 'u8[2048]{0}', space=vmem, size = 0x800, scoped, tag = 'input window, operand 2, single buffered']
    #allocation8 [shape = 'u8[2048]{0}', space=vmem, size = 0x800, scoped, tag = 'input window, operand 3, single buffered']
    #allocation9 [shape = 's32[1]{0}', space=sflag, size = 0x4, scoped, tag = 'scoped memory for tpu_custom_call.1']
    #allocation10 [shape = 'u8[4096]{0}', space=vmem, size = 0x1000, scoped, tag = 'output window, operand 0, single buffered']
    %11 = vsyncpa [#allocation3], 0
    %12 = vsyncpa [#allocation6], 0
    %13 = vsyncpa [#allocation9], 0
    %14 = vsyncpa [#allocation4], 0
    // Predicated region
    $region2: #{tpu_custom_call.1} parent=1 // pred_check
      _
    $region3: #{tpu_custom_call.1} parent=1 // pred_check_branch
      %16 = sbr.rel (0) target = $region5
    $region4: #{tpu_custom_call.1} parent=1 // pred_region
      %18 = vsyncadd [#allocation3], 0
      %s20 = sshll.u32 %s0, 4
      %s21 = int_to_ptr.hbm [resolvable:$true] %s20
      %s22 = sshll.u32 [#allocation2], 4
      %s23 = int_to_ptr.vmem [resolvable:$true] %s22
      %25 = dma.hbm_to_vmem [thread:$0]  %s21, 128, %s23, [#allocation3]
    $region5: #{tpu_custom_call.1} parent=1 // pred_fallthru
      _
    // Predicated region
    $region6: #{tpu_custom_call.1} parent=1 // pred_check
      _
    $region7: #{tpu_custom_call.1} parent=1 // pred_check_branch
      %27 = sbr.rel (0) target = $region9
    $region8: #{tpu_custom_call.1} parent=1 // pred_region
      %29 = vsyncadd [#allocation6], 0
      %s31 = sshll.u32 %s1, 4
      %s32 = int_to_ptr.hbm [resolvable:$true] %s31
      %s33 = sshll.u32 [#allocation5], 4
      %s34 = int_to_ptr.vmem [resolvable:$true] %s33
      %36 = dma.hbm_to_vmem [thread:$0]  %s32, 64, %s34, [#allocation6]
    $region9: #{tpu_custom_call.1} parent=1 // pred_fallthru
      _
    // Predicated region
    $region10: #{tpu_custom_call.1} parent=1 // pred_check
      _
    $region11: #{tpu_custom_call.1} parent=1 // pred_check_branch
      %38 = sbr.rel (0) target = $region13
    $region12: #{tpu_custom_call.1} parent=1 // pred_region
      %40 = vsyncadd [#allocation6], 0
      %s42 = sshll.u32 %s2, 4
      %s43 = int_to_ptr.hbm [resolvable:$true] %s42
      %s44 = sshll.u32 [#allocation7], 4
      %s45 = int_to_ptr.vmem [resolvable:$true] %s44
      %47 = dma.hbm_to_vmem [thread:$0]  %s43, 64, %s45, [#allocation6]
    $region13: #{tpu_custom_call.1} parent=1 // pred_fallthru
      _
    // Predicated region
    $region14: #{tpu_custom_call.1} parent=1 // pred_check
      _
    $region15: #{tpu_custom_call.1} parent=1 // pred_check_branch
      %49 = sbr.rel (0) target = $region17
    $region16: #{tpu_custom_call.1} parent=1 // pred_region
      %51 = vsyncadd [#allocation9], 0
      %s53 = sshll.u32 %s3, 4
      %s54 = int_to_ptr.hbm [resolvable:$true] %s53
      %s55 = sshll.u32 [#allocation8], 4
      %s56 = int_to_ptr.vmem [resolvable:$true] %s55
      %58 = dma.hbm_to_vmem [thread:$0]  %s54, 64, %s56, [#allocation9]
    $region17: #{tpu_custom_call.1} parent=1 // pred_fallthru
      _
    // Predicated region
    $region18: #{tpu_custom_call.1} parent=1 // pred_check
      _
    $region19: #{tpu_custom_call.1} parent=1 // pred_check_branch
      %60 = sbr.rel (0) target = $region21
    $region20: #{tpu_custom_call.1} parent=1 // pred_region
      _
    $region21: #{tpu_custom_call.1} parent=1 // pred_fallthru
      _
    // Predicated region
    $region22: #{tpu_custom_call.1} parent=1 // pred_check
      _
    $region23: #{tpu_custom_call.1} parent=1 // pred_check_branch
      %62 = sbr.rel (0) target = $region25
    $region24: #{tpu_custom_call.1} parent=1 // pred_region
      _
    $region25: #{tpu_custom_call.1} parent=1 // pred_fallthru
      _
    // Predicated region
    $region26: #{tpu_custom_call.1} parent=1 // pred_check
      _
    $region27: #{tpu_custom_call.1} parent=1 // pred_check_branch
      %64 = sbr.rel (0) target = $region29
    $region28: #{tpu_custom_call.1} parent=1 // pred_region
      %66 = dma.done [#allocation3], 128
    $region29: #{tpu_custom_call.1} parent=1 // pred_fallthru
      _
    // Predicated region
    $region30: #{tpu_custom_call.1} parent=1 // pred_check
      _
    $region31: #{tpu_custom_call.1} parent=1 // pred_check_branch
      %68 = sbr.rel (0) target = $region33
    $region32: #{tpu_custom_call.1} parent=1 // pred_region
      %70 = dma.done [#allocation6], 64
    $region33: #{tpu_custom_call.1} parent=1 // pred_fallthru
      _
    // Predicated region
    $region34: #{tpu_custom_call.1} parent=1 // pred_check
      _
    $region35: #{tpu_custom_call.1} parent=1 // pred_check_branch
      %72 = sbr.rel (0) target = $region37
    $region36: #{tpu_custom_call.1} parent=1 // pred_region
      %74 = dma.done [#allocation6], 64
    $region37: #{tpu_custom_call.1} parent=1 // pred_fallthru
      _
    // Predicated region
    $region38: #{tpu_custom_call.1} parent=1 // pred_check
      _
    $region39: #{tpu_custom_call.1} parent=1 // pred_check_branch
      %76 = sbr.rel (0) target = $region41
    $region40: #{tpu_custom_call.1} parent=1 // pred_region
      %78 = dma.done [#allocation9], 64
    $region41: #{tpu_custom_call.1} parent=1 // pred_fallthru
      _
    %v79 = vld [vmem:[#allocation5] sm:$0xf]
    %v80 = vld [vmem:[#allocation7] sm:$0xf]
    %v81 = vld [vmem:[#allocation8] sm:$0xf]
    %v82 = vld [vmem:[%s4] sm:$0x1]
    %v83 = vld [vmem:[%s5] sm:$0x1]
    %v84 = vld [vmem:[#allocation2] sm:$0x1]
    %v85 = vperm.slane %v84, 0
    %v86 = vmul.f32 %v79, %v85
    %v88 = vperm.slane %v82, 0
    %v90 = vmul.f32 %v80, %v88
    %v91 = vadd.f32 %v86, %v90
    %v92 = vadd.f32 %v91, %v81
    %v93 = vxor.u32 %v92, 2147483648
    %v94 = vmul.f32 %v93, 1.442695
    %v95 = vpow.pop %v94
    %v96 = vadd.f32 %v95, 1.0
    %v97 = vrcp.pop %v96
    %v98 = vmul.f32 %v96, %v97
    %v99 = vsub.f32 1.0, %v98
    %v100 = vmul.f32 %v97, %v99
    %v101 = vadd.f32 %v97, %v100
    %vm102 = vweird.f32 %v96
    %vm103 = vweird.f32 %v97
    %vm104 = vmor %vm102, %vm103
    %v105 = vsel %vm104, %v97, %v101
    %v106 = vand.u32 2147483647, %v96
    %vm107 = vcmp.eq.f32.partialorder %v106, 8.507059e+37
    %v108 = vand.u32 %v96, 2147483648
    %v109 = vor.u32 1.1754944e-38, %v108
    %v110 = vsel %vm107, %v109, %v105
    %v111 = vmul.f32 1.0, %v110
    %v112 = vtanh.pop %v92
    %v114 = vperm.slane %v83, 0
    %v116 = vmul.f32 %v111, %v114
    %v118 = vrot.slane %v112, 3
    %v120 = vmul.f32 %v111, %v118
    %v122 = vrot.slane %v120, 7
    %v124 = vadd.f32 %v116, %v122
    %v125 = vtanh.pop %v124
    %v127 = vrot.slane %v125, 7
    %v129 = vmul.f32 %v111, %v127
    %v130 = vmul.f32 %v129, 2.0
    %131 = vst [vmem:[#allocation10 - $0x2] sm:$0x4] %v130
    %v132 = vld [vmem:[#allocation2 + $0x1] sm:$0x1]
    %v133 = vperm.slane %v132, 0
    %v134 = vmul.f32 %v79, %v133
    %v135 = vperm.slane %v129, 2
    %v136 = vmul.f32 %v80, %v135
    %v137 = vadd.f32 %v134, %v136
    %v138 = vadd.f32 %v137, %v81
    %v139 = vxor.u32 %v138, 2147483648
    %v140 = vmul.f32 %v139, 1.442695
    %v141 = vpow.pop %v140
    %v142 = vadd.f32 %v141, 1.0
    %v143 = vrcp.pop %v142
    %v144 = vmul.f32 %v142, %v143
    %v145 = vsub.f32 1.0, %v144
    %v146 = vmul.f32 %v143, %v145
    %v147 = vadd.f32 %v143, %v146
    %vm148 = vweird.f32 %v142
    %vm149 = vweird.f32 %v143
    %vm150 = vmor %vm148, %vm149
    %v151 = vsel %vm150, %v143, %v147
    %v152 = vand.u32 2147483647, %v142
    %vm153 = vcmp.eq.f32.partialorder %v152, 8.507059e+37
    %v154 = vand.u32 %v142, 2147483648
    %v155 = vor.u32 1.1754944e-38, %v154
    %v156 = vsel %vm153, %v155, %v151
    %v157 = vmul.f32 1.0, %v156
    %v158 = vtanh.pop %v138
    %v159 = vmul.f32 %v157, %v124
    %v161 = vrot.slane %v158, 3
    %v163 = vmul.f32 %v157, %v161
    %v165 = vrot.slane %v163, 7
    %v167 = vadd.f32 %v159, %v165
    %v168 = vtanh.pop %v167
    %v170 = vrot.slane %v168, 7
    %v172 = vmul.f32 %v157, %v170
    %v173 = vmul.f32 %v172, 2.0
    %174 = vst [vmem:[#allocation10 - $0x1] sm:$0x4] %v173
    %v175 = vld [vmem:[#allocation2 + $0x2] sm:$0x1]
    %v176 = vperm.slane %v175, 0
    %v177 = vmul.f32 %v79, %v176
    %v178 = vperm.slane %v172, 2
    %v179 = vmul.f32 %v80, %v178
    %v180 = vadd.f32 %v177, %v179
    %v181 = vadd.f32 %v180, %v81
    %v182 = vxor.u32 %v181, 2147483648
    %v183 = vmul.f32 %v182, 1.442695
    %v184 = vpow.pop %v183
    %v185 = vadd.f32 %v184, 1.0
    %v186 = vrcp.pop %v185
    %v187 = vmul.f32 %v185, %v186
    %v188 = vsub.f32 1.0, %v187
    %v189 = vmul.f32 %v186, %v188
    %v190 = vadd.f32 %v186, %v189
    %vm191 = vweird.f32 %v185
    %vm192 = vweird.f32 %v186
    %vm193 = vmor %vm191, %vm192
    %v194 = vsel %vm193, %v186, %v190
    %v195 = vand.u32 2147483647, %v185
    %vm196 = vcmp.eq.f32.partialorder %v195, 8.507059e+37
    %v197 = vand.u32 %v185, 2147483648
    %v198 = vor.u32 1.1754944e-38, %v197
    %v199 = vsel %vm196, %v198, %v194
    %v200 = vmul.f32 1.0, %v199
    %v201 = vtanh.pop %v181
    %v202 = vmul.f32 %v200, %v167
    %v204 = vrot.slane %v201, 3
    %v206 = vmul.f32 %v200, %v204
    %v208 = vrot.slane %v206, 7
    %v210 = vadd.f32 %v202, %v208
    %v211 = vtanh.pop %v210
    %v213 = vrot.slane %v211, 7
    %v215 = vmul.f32 %v200, %v213
    %v216 = vmul.f32 %v215, 2.0
    %217 = vst [vmem:[#allocation10] sm:$0x4] %v216
    %v218 = vld [vmem:[#allocation2 + $0x3] sm:$0x1]
    %v219 = vperm.slane %v218, 0
    %v220 = vmul.f32 %v79, %v219
    %v221 = vperm.slane %v215, 2
    %v222 = vmul.f32 %v80, %v221
    %v223 = vadd.f32 %v220, %v222
    %v224 = vadd.f32 %v223, %v81
    %v225 = vxor.u32 %v224, 2147483648
    %v226 = vmul.f32 %v225, 1.442695
    %v227 = vpow.pop %v226
    %v228 = vadd.f32 %v227, 1.0
    %v229 = vrcp.pop %v228
    %v230 = vmul.f32 %v228, %v229
    %v231 = vsub.f32 1.0, %v230
    %v232 = vmul.f32 %v229, %v231
    %v233 = vadd.f32 %v229, %v232
    %vm234 = vweird.f32 %v228
    %vm235 = vweird.f32 %v229
    %vm236 = vmor %vm234, %vm235
    %v237 = vsel %vm236, %v229, %v233
    %v238 = vand.u32 2147483647, %v228
    %vm239 = vcmp.eq.f32.partialorder %v238, 8.507059e+37
    %v240 = vand.u32 %v228, 2147483648
    %v241 = vor.u32 1.1754944e-38, %v240
    %v242 = vsel %vm239, %v241, %v237
    %v243 = vmul.f32 1.0, %v242
    %v244 = vtanh.pop %v224
    %v245 = vmul.f32 %v243, %v210
    %v247 = vrot.slane %v244, 3
    %v249 = vmul.f32 %v243, %v247
    %v251 = vrot.slane %v249, 7
    %v253 = vadd.f32 %v245, %v251
    %v254 = vtanh.pop %v253
    %v256 = vrot.slane %v254, 7
    %v258 = vmul.f32 %v243, %v256
    %v259 = vmul.f32 %v258, 2.0
    %260 = vst [vmem:[#allocation10 + $0x1] sm:$0x4] %v259
    %v261 = vld [vmem:[#allocation2 + $0x4] sm:$0x1]
    %v262 = vperm.slane %v261, 0
    %v263 = vmul.f32 %v79, %v262
    %v264 = vperm.slane %v258, 2
    %v265 = vmul.f32 %v80, %v264
    %v266 = vadd.f32 %v263, %v265
    %v267 = vadd.f32 %v266, %v81
    %v268 = vxor.u32 %v267, 2147483648
    %v269 = vmul.f32 %v268, 1.442695
    %v270 = vpow.pop %v269
    %v271 = vadd.f32 %v270, 1.0
    %v272 = vrcp.pop %v271
    %v273 = vmul.f32 %v271, %v272
    %v274 = vsub.f32 1.0, %v273
    %v275 = vmul.f32 %v272, %v274
    %v276 = vadd.f32 %v272, %v275
    %vm277 = vweird.f32 %v271
    %vm278 = vweird.f32 %v272
    %vm279 = vmor %vm277, %vm278
    %v280 = vsel %vm279, %v272, %v276
    %v281 = vand.u32 2147483647, %v271
    %vm282 = vcmp.eq.f32.partialorder %v281, 8.507059e+37
    %v283 = vand.u32 %v271, 2147483648
    %v284 = vor.u32 1.1754944e-38, %v283
    %v285 = vsel %vm282, %v284, %v280
    %v286 = vmul.f32 1.0, %v285
    %v287 = vtanh.pop %v267
    %v288 = vmul.f32 %v286, %v253
    %v290 = vrot.slane %v287, 3
    %v292 = vmul.f32 %v286, %v290
    %v294 = vrot.slane %v292, 7
    %v296 = vadd.f32 %v288, %v294
    %v297 = vtanh.pop %v296
    %v299 = vrot.slane %v297, 7
    %v301 = vmul.f32 %v286, %v299
    %v302 = vmul.f32 %v301, 2.0
    %303 = vst [vmem:[#allocation10 + $0x2] sm:$0x4] %v302
    %v304 = vld [vmem:[#allocation2 + $0x5] sm:$0x1]
    %v305 = vperm.slane %v304, 0
    %v306 = vmul.f32 %v79, %v305
    %v307 = vperm.slane %v301, 2
    %v308 = vmul.f32 %v80, %v307
    %v309 = vadd.f32 %v306, %v308
    %v310 = vadd.f32 %v309, %v81
    %v311 = vxor.u32 %v310, 2147483648
    %v312 = vmul.f32 %v311, 1.442695
    %v313 = vpow.pop %v312
    %v314 = vadd.f32 %v313, 1.0
    %v315 = vrcp.pop %v314
    %v316 = vmul.f32 %v314, %v315
    %v317 = vsub.f32 1.0, %v316
    %v318 = vmul.f32 %v315, %v317
    %v319 = vadd.f32 %v315, %v318
    %vm320 = vweird.f32 %v314
    %vm321 = vweird.f32 %v315
    %vm322 = vmor %vm320, %vm321
    %v323 = vsel %vm322, %v315, %v319
    %v324 = vand.u32 2147483647, %v314
    %vm325 = vcmp.eq.f32.partialorder %v324, 8.507059e+37
    %v326 = vand.u32 %v314, 2147483648
    %v327 = vor.u32 1.1754944e-38, %v326
    %v328 = vsel %vm325, %v327, %v323
    %v329 = vmul.f32 1.0, %v328
    %v330 = vtanh.pop %v310
    %v331 = vmul.f32 %v329, %v296
    %v333 = vrot.slane %v330, 3
    %v335 = vmul.f32 %v329, %v333
    %v337 = vrot.slane %v335, 7
    %v339 = vadd.f32 %v331, %v337
    %v340 = vtanh.pop %v339
    %v342 = vrot.slane %v340, 7
    %v344 = vmul.f32 %v329, %v342
    %v345 = vmul.f32 %v344, 2.0
    %346 = vst [vmem:[#allocation10 + $0x3] sm:$0x4] %v345
    %v347 = vld [vmem:[#allocation2 + $0x6] sm:$0x1]
    %v348 = vperm.slane %v347, 0
    %v349 = vmul.f32 %v79, %v348
    %v350 = vperm.slane %v344, 2
    %v351 = vmul.f32 %v80, %v350
    %v352 = vadd.f32 %v349, %v351
    %v353 = vadd.f32 %v352, %v81
    %v354 = vxor.u32 %v353, 2147483648
    %v355 = vmul.f32 %v354, 1.442695
    %v356 = vpow.pop %v355
    %v357 = vadd.f32 %v356, 1.0
    %v358 = vrcp.pop %v357
    %v359 = vmul.f32 %v357, %v358
    %v360 = vsub.f32 1.0, %v359
    %v361 = vmul.f32 %v358, %v360
    %v362 = vadd.f32 %v358, %v361
    %vm363 = vweird.f32 %v357
    %vm364 = vweird.f32 %v358
    %vm365 = vmor %vm363, %vm364
    %v366 = vsel %vm365, %v358, %v362
    %v367 = vand.u32 2147483647, %v357
    %vm368 = vcmp.eq.f32.partialorder %v367, 8.507059e+37
    %v369 = vand.u32 %v357, 2147483648
    %v370 = vor.u32 1.1754944e-38, %v369
    %v371 = vsel %vm368, %v370, %v366
    %v372 = vmul.f32 1.0, %v371
    %v373 = vtanh.pop %v353
    %v374 = vmul.f32 %v372, %v339
    %v376 = vrot.slane %v373, 3
    %v378 = vmul.f32 %v372, %v376
    %v380 = vrot.slane %v378, 7
    %v382 = vadd.f32 %v374, %v380
    %v383 = vtanh.pop %v382
    %v385 = vrot.slane %v383, 7
    %v387 = vmul.f32 %v372, %v385
    %v388 = vmul.f32 %v387, 2.0
    %389 = vst [vmem:[#allocation10 + $0x4] sm:$0x4] %v388
    %v390 = vld [vmem:[#allocation2 + $0x7] sm:$0x1]
    %v391 = vperm.slane %v390, 0
    %v392 = vmul.f32 %v79, %v391
    %v393 = vperm.slane %v387, 2
    %v394 = vmul.f32 %v80, %v393
    %v395 = vadd.f32 %v392, %v394
    %v396 = vadd.f32 %v395, %v81
    %v397 = vxor.u32 %v396, 2147483648
    %v398 = vmul.f32 %v397, 1.442695
    %v399 = vpow.pop %v398
    %v400 = vadd.f32 %v399, 1.0
    %v401 = vrcp.pop %v400
    %v402 = vmul.f32 %v400, %v401
    %v403 = vsub.f32 1.0, %v402
    %v404 = vmul.f32 %v401, %v403
    %v405 = vadd.f32 %v401, %v404
    %vm406 = vweird.f32 %v400
    %vm407 = vweird.f32 %v401
    %vm408 = vmor %vm406, %vm407
    %v409 = vsel %vm408, %v401, %v405
    %v410 = vand.u32 2147483647, %v400
    %vm411 = vcmp.eq.f32.partialorder %v410, 8.507059e+37
    %v412 = vand.u32 %v400, 2147483648
    %v413 = vor.u32 1.1754944e-38, %v412
    %v414 = vsel %vm411, %v413, %v409
    %v415 = vmul.f32 1.0, %v414
    %v416 = vtanh.pop %v396
    %v417 = vmul.f32 %v415, %v382
    %v419 = vrot.slane %v416, 3
    %v421 = vmul.f32 %v415, %v419
    %v423 = vrot.slane %v421, 7
    %v425 = vadd.f32 %v417, %v423
    %v426 = vtanh.pop %v425
    %v428 = vrot.slane %v426, 7
    %v430 = vmul.f32 %v415, %v428
    %v431 = vmul.f32 %v430, 2.0
    %432 = vst [vmem:[#allocation10 + $0x5] sm:$0x4] %v431
    // Predicated region
    $region42: #{tpu_custom_call.1} parent=1 // pred_check
      _
    $region43: #{tpu_custom_call.1} parent=1 // pred_check_branch
      %434 = sbr.rel (0) target = $region45
    $region44: #{tpu_custom_call.1} parent=1 // pred_region
      %436 = vsyncadd [#allocation4], 0
      %s438 = sshll.u32 [#allocation10], 4
      %s439 = int_to_ptr.vmem [resolvable:$true] %s438
      %s440 = sshll.u32 %s6, 4
      %s441 = int_to_ptr.hbm [resolvable:$true] %s440
      %443 = dma.vmem_to_hbm [thread:$0]  %s439, 128, %s441, [#allocation4]
    $region45: #{tpu_custom_call.1} parent=1 // pred_fallthru
      _
    // Predicated region
    $region46: #{tpu_custom_call.1} parent=1 // pred_check
      _
    $region47: #{tpu_custom_call.1} parent=1 // pred_check_branch
      %445 = sbr.rel (0) target = $region49
    $region48: #{tpu_custom_call.1} parent=1 // pred_region
      %447 = dma.done [#allocation4], 128
    $region49: #{tpu_custom_call.1} parent=1 // pred_fallthru
      _
    %448 = vsyncpa [#allocation3], 1
    %449 = vsyncpa [#allocation6], 1
    %450 = vsyncpa [#allocation9], 1
    %451 = vsyncpa [#allocation4], 1

</llo_original>
